<compile_context>
chip_gen: v6e
topology: v6e:2x2x1
jax: 0.10.0
libtpu: 0.0.40
codegen_flags: <defaults>
</compile_context>

<pallas_src>
import functools

import jax
import jax.numpy as jnp
from jax.experimental import pallas as pl
from jax.experimental.pallas import tpu as pltpu


def _mixture_net_kernel(x_ref, w_ref, b_ref, out_ref, *, C, L, epsilon):
    """Fused: y = x @ W_perm + b_perm, then mixture head, one lane-dense store."""
    tn = x_ref.shape[0]
    CL = C * L

    # ---- MXU: (tn, L) @ (L, out_pad) -> (tn, out_pad), f32 accumulation ----------
    y = jnp.dot(x_ref[...], w_ref[...], preferred_element_type=jnp.float32)
    y = y + b_ref[...]                       # bias added once per tile, in f32

    # ---- Head epilogue: contiguous lane slices only (W was permuted on the host) --
    mu = y[:, 0:CL]                          # untouched matmul output lanes
    std = y[:, CL:2 * CL]
    logits = y[:, 2 * CL:3 * CL]

    # softplus(std) = max(std, 0) + log1p(exp(-|std|))   (stable, == F.softplus)
    sp = jnp.maximum(std, 0.0) + jnp.log1p(jnp.exp(-jnp.abs(std)))
    log_std = jnp.log(sp + epsilon)

    # log_softmax over the mixture axis C: the logits slab is laid out as C
    # contiguous width-L chunks, so reduce over those chunks with a static loop
    # (C is a compile-time constant) -- no in-kernel reshapes / strided slices.
    m = logits[:, 0:L]
    for c in range(1, C):
        m = jnp.maximum(m, logits[:, c * L:(c + 1) * L])           # (tn, L)
    ssum = jnp.exp(logits[:, 0:L] - m)
    for c in range(1, C):
        ssum = ssum + jnp.exp(logits[:, c * L:(c + 1) * L] - m)
    lse = m + jnp.log(ssum)                                        # (tn, L)
    lse_full = jnp.concatenate([lse] * C, axis=1)                  # (tn, CL)
    log_w = logits - lse_full

    # ---- Single fused, lane-dense store: (tn, out_pad) unmasked vst ---------------
    parts = [mu, log_std, log_w]
    pad = out_ref.shape[1] - 3 * CL
    if pad:
        parts.append(jnp.zeros((tn, pad), jnp.float32))
    out_ref[...] = jnp.concatenate(parts, axis=1)


def mixture_net_forward(x, W, b, n_mixtures, *, tn=2048, epsilon=1e-4,
                        matmul_dtype=jnp.float32):
    """Pallas implementation of MixtureNet.forward with net = Linear(L, 3*C*L).

    x: (N, L) f32.  W: (L, 3*C*L) (Linear weight already transposed).  b: (3*C*L,).
    Returns mu, log_std, log_weights, each (N, C, L) f32.
    """
    N, L = x.shape
    C = n_mixtures
    CL = C * L
    out_dim = 3 * CL
    assert W.shape == (L, out_dim), (W.shape, (L, out_dim))
    assert b.shape == (out_dim,), (b.shape, (out_dim,))

    # --- One-time host-side column permutation: interleaved (C, 3, L) columns ->
    #     three contiguous slabs [mu | std | logits], each C*L wide.
    W_p = W.reshape(L, C, 3, L).transpose(0, 2, 1, 3).reshape(L, out_dim)
    b_p = b.reshape(C, 3, L).transpose(1, 0, 2).reshape(out_dim)

    # --- Zero-pad output columns up to a multiple of 128 lanes (full-width stores).
    out_pad = pl.cdiv(out_dim, 128) * 128
    if out_pad != out_dim:
        W_p = jnp.pad(W_p, ((0, 0), (0, out_pad - out_dim)))
        b_p = jnp.pad(b_p, ((0, out_pad - out_dim),))

    # --- Tile selection: multiple of 16 rows; clamp so the grid has >=2 steps when
    #     the batch allows (v7x megacore sharding); pad N up to a tile multiple.
    tn_req = max(16, (int(tn) // 16) * 16)
    tn_cap = max(16, (((N + 1) // 2 + 15) // 16) * 16)     # ~half the batch, 16-aligned
    tn_eff = min(tn_req, tn_cap)
    n_pad = pl.cdiv(N, tn_eff) * tn_eff
    if n_pad != N:
        x = jnp.pad(x, ((0, n_pad - N), (0, 0)))  # padded rows compute finite garbage, sliced off

    x_mm = x.astype(matmul_dtype)
    w_mm = W_p.astype(matmul_dtype)
    b2 = b_p.reshape(1, out_pad).astype(jnp.float32)

    # --- Explicit VMEM budget: 2x(x tile) + W + b + 2x(fused output tile), with 2x headroom.
    itemsize = jnp.dtype(matmul_dtype).itemsize
    vmem_bytes = (2 * tn_eff * L * itemsize        # x, double-buffered
                  + 2 * L * out_pad * itemsize     # W (grid-constant, conservatively 2x)
                  + 2 * out_pad * 4                # b
                  + 2 * tn_eff * out_pad * 4)      # fused f32 output, double-buffered
    vmem_limit = int(min(64 << 20, max(32 << 20, 2 * vmem_bytes)))
    # TODO(synk): at production L/C where W no longer fits comfortably, add
    # pipeline_mode=pl.Buffered(1) on the W/b BlockSpecs (grid-constant) or halve tn on v7x.

    kernel = functools.partial(_mixture_net_kernel, C=C, L=L, epsilon=epsilon)

    out = pl.pallas_call(
        kernel,
        out_shape=jax.ShapeDtypeStruct((n_pad, out_pad), jnp.float32),
        grid=(n_pad // tn_eff,),
        in_specs=[
            pl.BlockSpec((tn_eff, L), lambda i: (i, 0)),      # x tile, pipelined over N
            pl.BlockSpec((L, out_pad), lambda i: (0, 0)),     # W: VMEM-resident, permuted+padded
            pl.BlockSpec((1, out_pad), lambda i: (0, 0)),     # b: VMEM-resident
        ],
        out_specs=pl.BlockSpec((tn_eff, out_pad), lambda i: (i, 0)),   # single fused slab
        compiler_params=pltpu.CompilerParams(
            dimension_semantics=("parallel",),                # megacore-shardable on v7x
            vmem_limit_bytes=vmem_limit,
        ),
    )(x_mm, w_mm, b2)

    # Layout glue only: trim row/column padding, present the (N, C, L) views.
    mu = out[:N, 0:CL].reshape(N, C, L)
    log_std = out[:N, CL:2 * CL].reshape(N, C, L)
    log_w = out[:N, 2 * CL:3 * CL].reshape(N, C, L)
    return mu, log_std, log_w


def _reference(x, W, b, n_mixtures, epsilon=1e-4):
    """Pure-JAX reference mirroring the PyTorch forward (f32 throughout)."""
    N, L = x.shape
    C = n_mixtures
    y = jnp.dot(x, W, preferred_element_type=jnp.float32) + b
    y3 = y.reshape(N, C, 3 * L)
    mu, std, logits = y3[..., :L], y3[..., L:2 * L], y3[..., 2 * L:]
    log_w = jax.nn.log_softmax(logits, axis=1)
    log_std = jnp.log(jax.nn.softplus(std) + epsilon)
    return mu, log_std, log_w


if __name__ == "__main__":
    # Small shapes consistent with the module: batch N=50 (not a tile multiple, to
    # exercise row padding and the >=2-grid-step clamp), input_dim L=8, n_mixtures C=4.
    N, L, C = 50, 8, 4
    out_dim = 3 * C * L

    key = jax.random.PRNGKey(0)
    kx, kw, kb = jax.random.split(key, 3)
    x = jax.random.normal(kx, (N, L), dtype=jnp.float32)
    # Deterministic synthetic Linear(L, 3*C*L) parameters (already transposed to (L, out)).
    W = jax.random.normal(kw, (L, out_dim), dtype=jnp.float32) * (1.0 / jnp.sqrt(L))
    b = jax.random.normal(kb, (out_dim,), dtype=jnp.float32) * 0.1

    mu, log_std, log_w = mixture_net_forward(x, W, b, C, epsilon=1e-4)
    jax.block_until_ready((mu, log_std, log_w))

    mu_r, log_std_r, log_w_r = _reference(x, W, b, C, epsilon=1e-4)
    assert mu.shape == (N, C, L) and log_std.shape == (N, C, L) and log_w.shape == (N, C, L)
    assert jnp.allclose(mu, mu_r, rtol=1e-3, atol=1e-3)
    assert jnp.allclose(log_std, log_std_r, rtol=1e-3, atol=1e-3)
    assert jnp.allclose(log_w, log_w_r, rtol=1e-3, atol=1e-3)

    print("KERNEL_OK")
</pallas_src>

<mosaic_0001>
module attributes {stable_mosaic.version = 11 : i64} {
  func.func @_mixture_net_kernel(%arg0: i32, %arg1: memref<32x8xf32, #tpu.memory_space<vmem>>, %arg2: memref<8x128xf32, #tpu.memory_space<vmem>>, %arg3: memref<1x128xf32, #tpu.memory_space<vmem>>, %arg4: memref<32x128xf32, #tpu.memory_space<vmem>>) attributes {dimension_semantics = [#tpu.dimension_semantics<parallel>], iteration_bounds = array<i64: 2>, scalar_prefetch = 0 : i64, scratch_operands = 0 : i64, tpu.core_type = #tpu.core_type<tc>, window_params = [{transform_indices = @transform_0, window_bounds = array<i64: 32, 8>}, {pipeline_mode = #tpu.pipeline_mode<synchronous>, transform_indices = @transform_1, window_bounds = array<i64: 8, 128>}, {pipeline_mode = #tpu.pipeline_mode<synchronous>, transform_indices = @transform_2, window_bounds = array<i64: 1, 128>}, {transform_indices = @transform_3, window_bounds = array<i64: 32, 128>}]} {
    %c0 = arith.constant 0 : index
    %c0_0 = arith.constant 0 : index
    %0 = vector.load %arg1[%c0, %c0_0] : memref<32x8xf32, #tpu.memory_space<vmem>>, vector<32x8xf32>
    %c0_1 = arith.constant 0 : index
    %c0_2 = arith.constant 0 : index
    %1 = vector.load %arg2[%c0_1, %c0_2] : memref<8x128xf32, #tpu.memory_space<vmem>>, vector<8x128xf32>
    %cst = arith.constant dense<0.000000e+00> : vector<32x128xf32>
    %2 = tpu.matmul %0, %1, %cst {dimension_numbers = #tpu.dot_dimension_numbers<[1], [0], [0], [1], [0, 0, 1, 1], [], []>} : vector<32x8xf32>, vector<8x128xf32>, vector<32x128xf32> -> vector<32x128xf32>
    %c0_3 = arith.constant 0 : index
    %c0_4 = arith.constant 0 : index
    %3 = vector.load %arg3[%c0_3, %c0_4] : memref<1x128xf32, #tpu.memory_space<vmem>>, vector<1x128xf32>
    %4 = vector.broadcast %3 : vector<1x128xf32> to vector<32x128xf32>
    %5 = arith.addf %2, %4 : vector<32x128xf32>
    %6 = vector.extract_strided_slice %5 {offsets = [0, 0], sizes = [32, 32], strides = [1, 1]} : vector<32x128xf32> to vector<32x32xf32>
    %7 = vector.extract_strided_slice %5 {offsets = [0, 32], sizes = [32, 32], strides = [1, 1]} : vector<32x128xf32> to vector<32x32xf32>
    %8 = vector.extract_strided_slice %5 {offsets = [0, 64], sizes = [32, 32], strides = [1, 1]} : vector<32x128xf32> to vector<32x32xf32>
    %cst_5 = arith.constant 0.000000e+00 : f32
    %9 = vector.broadcast %cst_5 : f32 to vector<32x32xf32>
    %10 = arith.maximumf %7, %9 : vector<32x32xf32>
    %11 = math.absf %7 : vector<32x32xf32>
    %cst_6 = arith.constant 0.000000e+00 : f32
    %12 = vector.broadcast %cst_6 : f32 to vector<32x32xf32>
    %13 = arith.subf %12, %11 : vector<32x32xf32>
    %14 = math.exp %13 : vector<32x32xf32>
    %15 = math.log1p %14 : vector<32x32xf32>
    %16 = arith.addf %10, %15 : vector<32x32xf32>
    %cst_7 = arith.constant 9.99999974E-5 : f32
    %17 = vector.broadcast %cst_7 : f32 to vector<32x32xf32>
    %18 = arith.addf %16, %17 : vector<32x32xf32>
    %19 = math.log %18 : vector<32x32xf32>
    %20 = vector.extract_strided_slice %8 {offsets = [0, 0], sizes = [32, 8], strides = [1, 1]} : vector<32x32xf32> to vector<32x8xf32>
    %21 = vector.extract_strided_slice %8 {offsets = [0, 8], sizes = [32, 8], strides = [1, 1]} : vector<32x32xf32> to vector<32x8xf32>
    %22 = arith.maximumf %20, %21 : vector<32x8xf32>
    %23 = vector.extract_strided_slice %8 {offsets = [0, 16], sizes = [32, 8], strides = [1, 1]} : vector<32x32xf32> to vector<32x8xf32>
    %24 = arith.maximumf %22, %23 : vector<32x8xf32>
    %25 = vector.extract_strided_slice %8 {offsets = [0, 24], sizes = [32, 8], strides = [1, 1]} : vector<32x32xf32> to vector<32x8xf32>
    %26 = arith.maximumf %24, %25 : vector<32x8xf32>
    %27 = vector.extract_strided_slice %8 {offsets = [0, 0], sizes = [32, 8], strides = [1, 1]} : vector<32x32xf32> to vector<32x8xf32>
    %28 = arith.subf %27, %26 : vector<32x8xf32>
    %29 = math.exp %28 : vector<32x8xf32>
    %30 = vector.extract_strided_slice %8 {offsets = [0, 8], sizes = [32, 8], strides = [1, 1]} : vector<32x32xf32> to vector<32x8xf32>
    %31 = arith.subf %30, %26 : vector<32x8xf32>
    %32 = math.exp %31 : vector<32x8xf32>
    %33 = arith.addf %29, %32 : vector<32x8xf32>
    %34 = vector.extract_strided_slice %8 {offsets = [0, 16], sizes = [32, 8], strides = [1, 1]} : vector<32x32xf32> to vector<32x8xf32>
    %35 = arith.subf %34, %26 : vector<32x8xf32>
    %36 = math.exp %35 : vector<32x8xf32>
    %37 = arith.addf %33, %36 : vector<32x8xf32>
    %38 = vector.extract_strided_slice %8 {offsets = [0, 24], sizes = [32, 8], strides = [1, 1]} : vector<32x32xf32> to vector<32x8xf32>
    %39 = arith.subf %38, %26 : vector<32x8xf32>
    %40 = math.exp %39 : vector<32x8xf32>
    %41 = arith.addf %37, %40 : vector<32x8xf32>
    %42 = math.log %41 : vector<32x8xf32>
    %43 = arith.addf %26, %42 : vector<32x8xf32>
    %44 = tpu.concatenate %43, %43, %43, %43 in 1 : vector<32x8xf32>, vector<32x8xf32>, vector<32x8xf32>, vector<32x8xf32> -> vector<32x32xf32>
    %45 = arith.subf %8, %44 : vector<32x32xf32>
    %cst_8 = arith.constant 0.000000e+00 : f32
    %46 = vector.broadcast %cst_8 : f32 to vector<32x32xf32>
    %47 = tpu.concatenate %6, %19, %45, %46 in 1 : vector<32x32xf32>, vector<32x32xf32>, vector<32x32xf32>, vector<32x32xf32> -> vector<32x128xf32>
    %c0_9 = arith.constant 0 : index
    %c0_10 = arith.constant 0 : index
    %48 = vector.load %arg4[%c0_9, %c0_10] : memref<32x128xf32, #tpu.memory_space<vmem>>, vector<32x128xf32>
    tpu.vector_store %arg4[%c0_9, %c0_10], %47 {strides = array<i32>} : memref<32x128xf32, #tpu.memory_space<vmem>>, vector<32x128xf32>,
    return
  }
  func.func @transform_0(%arg0: i32) -> (i32, i32) {
    %c0_i32 = arith.constant 0 : i32
    %c0_i32_0 = arith.constant 0 : i32
    return %arg0, %c0_i32 : i32, i32
  }
  func.func @transform_1(%arg0: i32) -> (i32, i32) {
    %c0_i32 = arith.constant 0 : i32
    %c0_i32_0 = arith.constant 0 : i32
    %c0_i32_1 = arith.constant 0 : i32
    return %c0_i32, %c0_i32_0 : i32, i32
  }
  func.func @transform_2(%arg0: i32) -> (i32, i32) {
    %c0_i32 = arith.constant 0 : i32
    %c0_i32_0 = arith.constant 0 : i32
    %c0_i32_1 = arith.constant 0 : i32
    return %c0_i32, %c0_i32_0 : i32, i32
  }
  func.func @transform_3(%arg0: i32) -> (i32, i32) {
    %c0_i32 = arith.constant 0 : i32
    %c0_i32_0 = arith.constant 0 : i32
    return %arg0, %c0_i32 : i32, i32
  }
}

</mosaic_0001>

<llo_original>
// kernel: tpu_custom_call.1
$region0: #{tpu_custom_call.1}
  #allocation0 [shape = 'u32[]', space=smem, size = 0x4, offset = 0x4, fixed_abs, tag = 'smem constant byte address 0x4 - core index']
  #allocation1 [shape = 'u32[144,128]{1,0:T(1,128)}', space=vmem, size = 0x12000, scoped, tag = 'internal scratch']
  %s0 = inlined_call_operand.vmem [shape: f32[64,8], index: 0, kind: input, shape index: {}]
  %s1 = inlined_call_operand.vmem [shape: f32[8,128], index: 1, kind: input, shape index: {}]
  %s2 = inlined_call_operand.vmem [shape: f32[1,128], index: 2, kind: input, shape index: {}]
  %s3 = inlined_call_operand.hbm [shape: f32[64,128], index: 3, kind: output, shape index: {}]
  %s4 = sld [smem:[#allocation0]]
  $region45: #{tpu_custom_call.1} parent=0
    _
  %s6 = ssub.s32 1, %s4
  %s7 = scalar_select 0, %s6, %s4
  $region1: #{tpu_custom_call.1} parent=0
    #allocation2 [shape = 'u8[32768]{0}', space=vmem, size = 0x8000, scoped, tag = 'output window, operand 0']
    #allocation3 [shape = 's32[2]{0}', space=sflag, size = 0x8, scoped, tag = 'scoped memory for tpu_custom_call.1']
    %8 = vsyncpa [#allocation3], 0
    %s9 = scalar_lea.sflag [#allocation3], 1
    %10 = vsyncpa %s9, 0
    loop: start=0, step=1, limit=4
    $region2: #{tpu_custom_call.1} parent=1 // loop_pre_header
      _
    $region3: #{tpu_custom_call.1} parent=1 // loop_header
      %s12 = sphi 0, %s16
      %p13 = scmp.ge.s32.totalorder %s12, 4
      %s22 = sphi 0, %s24
      %s25 = sphi 0, %s22
      %s26 = sphi 0, %s25
      %s42 = sphi 0, %s26
      %s46 = sphi 0, %s46
      %s48 = sphi 0, %s46
      %s49 = sphi 0, %s48
      %s63 = sphi 0, %s49
      %s67 = sphi 0, %s67
      %s69 = sphi 0, %s67
      %s70 = sphi 0, %s69
      %s84 = sphi 0, %s70
      %s90 = sphi 0, %s92
      %s93 = sphi 0, %s90
      %s94 = sphi 0, %s93
      %s110 = sphi 0, %s94
    $region4: #{tpu_custom_call.1} parent=1 // loop_header_branch
      %15 = sbr.rel (%p13) target = $region8
    $region5: #{tpu_custom_call.1} parent=1 // loop_body
      %s17 = ssub.s32 %s12, 1
      %s18 = ssub.s32 %s12, 2
      %s19 = sadd.s32 %s12, 1
      %s20 = ssub.s32 %s12, %s19
      %p21 = scmp.eq.s32.totalorder %s20, 0
      %s23 = sadd.s32 %s22, 1
      %s24 = scalar_select %p21, %s22, %s23
      %p27 = pneg %p21
      %p28 = scmp.eq.s32.totalorder %s12, 1
      %p29 = por %p27, %p28
      %p30 = scmp.ne.s32.totalorder %s22, %s25
      %p31 = scmp.eq.s32.totalorder %s12, 0
      %p32 = por %p30, %p31
      %p33 = scmp.ne.s32.totalorder %s22, %s25
      %p34 = scmp.eq.s32.totalorder %s17, 1
      %p35 = por %p33, %p34
      %p36 = scmp.ne.s32.totalorder %s25, %s26
      %p37 = scmp.eq.s32.totalorder %s17, 0
      %p38 = por %p36, %p37
      %p39 = scmp.ne.s32.totalorder %s25, %s26
      %p40 = scmp.eq.s32.totalorder %s18, 1
      %p41 = por %p39, %p40
      %p43 = scmp.ne.s32.totalorder %s26, %s42
      %p44 = scmp.eq.s32.totalorder %s18, 0
      %p45 = por %p43, %p44
      %s47 = sadd.s32 %s46, 1
      %p50 = scmp.eq.s32.totalorder %s12, 1
      %p51 = scmp.ne.s32.totalorder %s46, %s48
      %p52 = scmp.eq.s32.totalorder %s12, 0
      %p53 = por %p51, %p52
      %p54 = scmp.ne.s32.totalorder %s46, %s48
      %p55 = scmp.eq.s32.totalorder %s17, 1
      %p56 = por %p54, %p55
      %p57 = scmp.ne.s32.totalorder %s48, %s49
      %p58 = scmp.eq.s32.totalorder %s17, 0
      %p59 = por %p57, %p58
      %p60 = scmp.ne.s32.totalorder %s48, %s49
      %p61 = scmp.eq.s32.totalorder %s18, 1
      %p62 = por %p60, %p61
      %p64 = scmp.ne.s32.totalorder %s49, %s63
      %p65 = scmp.eq.s32.totalorder %s18, 0
      %p66 = por %p64, %p65
      %s68 = sadd.s32 %s67, 1
      %p71 = scmp.eq.s32.totalorder %s12, 1
      %p72 = scmp.ne.s32.totalorder %s67, %s69
      %p73 = scmp.eq.s32.totalorder %s12, 0
      %p74 = por %p72, %p73
      %p75 = scmp.ne.s32.totalorder %s67, %s69
      %p76 = scmp.eq.s32.totalorder %s17, 1
      %p77 = por %p75, %p76
      %p78 = scmp.ne.s32.totalorder %s69, %s70
      %p79 = scmp.eq.s32.totalorder %s17, 0
      %p80 = por %p78, %p79
      %p81 = scmp.ne.s32.totalorder %s69, %s70
      %p82 = scmp.eq.s32.totalorder %s18, 1
      %p83 = por %p81, %p82
      %p85 = scmp.ne.s32.totalorder %s70, %s84
      %p86 = scmp.eq.s32.totalorder %s18, 0
      %p87 = por %p85, %p86
      %s88 = ssub.s32 %s12, %s19
      %p89 = scmp.eq.s32.totalorder %s88, 0
      %s91 = sadd.s32 %s90, 1
      %s92 = scalar_select %p89, %s90, %s91
      %p95 = pneg %p89
      %p96 = scmp.eq.s32.totalorder %s12, 1
      %p97 = por %p95, %p96
      %p98 = scmp.ne.s32.totalorder %s90, %s93
      %p99 = scmp.eq.s32.totalorder %s12, 0
      %p100 = por %p98, %p99
      %p101 = scmp.ne.s32.totalorder %s90, %s93
      %p102 = scmp.eq.s32.totalorder %s17, 1
      %p103 = por %p101, %p102
      %p104 = scmp.ne.s32.totalorder %s93, %s94
      %p105 = scmp.eq.s32.totalorder %s17, 0
      %p106 = por %p104, %p105
      %p107 = scmp.ne.s32.totalorder %s93, %s94
      %p108 = scmp.eq.s32.totalorder %s18, 1
      %p109 = por %p107, %p108
      %p111 = scmp.ne.s32.totalorder %s94, %s110
      %p112 = scmp.eq.s32.totalorder %s18, 0
      %p113 = por %p111, %p112
      %p114 = scmp.le.s32.totalorder 1, %s12
      %p115 = scmp.lt.s32.totalorder %s12, 3
      %p116 = pnand %p114, %p115
      %p117 = pneg %p116
      // Predicated region
      $region9: #{tpu_custom_call.1} parent=5 // pred_check
        _
      $region10: #{tpu_custom_call.1} parent=5 // pred_check_branch
        %119 = sbr.rel (%p116) target = $region12
      $region11: #{tpu_custom_call.1} parent=5 // pred_region
        %s120 = ssub.s32 %s12, 1
        // Predicated region
        $region13: #{tpu_custom_call.1} parent=11 // pred_check
          %p121 = pneg %p59
        $region14: #{tpu_custom_call.1} parent=11 // pred_check_branch
          %123 = sbr.rel (%p121) target = $region16
        $region15: #{tpu_custom_call.1} parent=11 // pred_region
          _
        $region16: #{tpu_custom_call.1} parent=11 // pred_fallthru
          _
        // Predicated region
        $region17: #{tpu_custom_call.1} parent=11 // pred_check
          %p124 = pneg %p80
        $region18: #{tpu_custom_call.1} parent=11 // pred_check_branch
          %126 = sbr.rel (%p124) target = $region20
        $region19: #{tpu_custom_call.1} parent=11 // pred_region
          _
        $region20: #{tpu_custom_call.1} parent=11 // pred_fallthru
          _
      $region12: #{tpu_custom_call.1} parent=5 // pred_fallthru
        _
      %p127 = scmp.lt.s32.totalorder %s12, 2
      // Predicated region
      $region21: #{tpu_custom_call.1} parent=5 // pred_check
        %p128 = pneg %p127
      $region22: #{tpu_custom_call.1} parent=5 // pred_check_branch
        %130 = sbr.rel (%p128) target = $region24
      $region23: #{tpu_custom_call.1} parent=5 // pred_region
        // Predicated region
        $region25: #{tpu_custom_call.1} parent=23 // pred_check
          %p131 = pneg %p32
        $region26: #{tpu_custom_call.1} parent=23 // pred_check_branch
          %133 = sbr.rel (%p131) target = $region28
        $region27: #{tpu_custom_call.1} parent=23 // pred_region
          %s134 = smul.u32 4, %s12
          %p135 = scmp.lt.s32.totalorder %s134, 7
          %s136 = scalar_select %p135, %s134, 7
          %s137 = smul.addr %s136, 8
          %s138 = scalar_lea.vmem %s0, %s137
          %s139 = smul.u32 4, %s12
        $region28: #{tpu_custom_call.1} parent=23 // pred_fallthru
          _
      $region24: #{tpu_custom_call.1} parent=5 // pred_fallthru
        _
      %p140 = scmp.le.s32.totalorder 1, %s12
      %p141 = scmp.lt.s32.totalorder %s12, 3
      %p142 = pnand %p140, %p141
      %p143 = pneg %p142
      // Predicated region
      $region29: #{tpu_custom_call.1} parent=5 // pred_check
        _
      $region30: #{tpu_custom_call.1} parent=5 // pred_check_branch
        %145 = sbr.rel (%p142) target = $region32
      $region31: #{tpu_custom_call.1} parent=5 // pred_region
        %s146 = ssub.s32 %s12, 1
        %s147 = smul.u32 4, %s17
        %p148 = scmp.lt.s32.totalorder %s147, 7
        %s149 = scalar_select %p148, %s147, 7
        %s150 = smul.addr %s149, 8
        %s151 = scalar_lea.vmem %s0, %s150
        %p152 = pneg %p38
        %p153 = pneg %p35
        %p154 = pneg %p59
        %p155 = pneg %p56
        %p156 = pneg %p80
        %p157 = pneg %p77
        %p158 = pneg %p106
        %p159 = pneg %p103
        %s160 = sand.u32 %s93, 1
        %s161 = scalar_lea.sflag [#allocation3], %s160
        %s162 = sand.u32 %s93, 1
        %s163 = smul.addr %s162, 32
        %s164 = scalar_lea.vmem [#allocation2], %s163
        %s165 = smul.u32 4, %s17
        %p166 = scmp.lt.s32.totalorder %s165, 7
        %s167 = scalar_select %p166, %s165, 7
        %s168 = smul.addr %s167, 8
        %s169 = scalar_lea.vmem %s0, %s168
        %s170 = smul.u32 4, %s17
        %s171 = smul.u32 4, %s17
        %v172 = vld [vmem:[%s169] sm:$0xff]
        %v173 = vld [vmem:[%s169 + $0x8] sm:$0xff]
        %v174 = vld [vmem:[%s169 + $0x10] sm:$0xff]
        %v175 = vld [vmem:[%s169 + $0x18] sm:$0xff]
        %v176 = vld [vmem:[%s1] sm:$0xff]
        %v177 = vld [vmem:[%s2] sm:$0x1]
        %v179 = vlaneseq
        %v180 = vshrl.u32 %v179, 7
        %v181 = vsub.s32 0, %v180
        %v182 = vrot.slane %v177, %v181
        %vm184 = vcmask 64512
        %v186 = vsel %vm184, %v172, 0
        %v189 = vsel %vm184, %v173, 0
        %v192 = vsel %vm184, %v174, 0
        %v195 = vsel %vm184, %v175, 0
        %197 = vmatprep.subr.mxu0 0.0
        %198 = vmatpush1.msra.mxu0 0.0
        %199 = vmatprep.subr.mxu0 0.0
        %200 = vmatpush1.msra.mxu0 0.0
        %201 = vmatprep.subr.mxu0 0.0
        %202 = vmatpush1.msra.mxu0 0.0
        %203 = vmatprep.subr.mxu0 0.0
        %204 = vmatpush1.msra.mxu0 0.0
        %205 = vmatprep.subr.mxu0 0.0
        %206 = vmatpush1.msra.mxu0 0.0
        %207 = vmatprep.subr.mxu0 0.0
        %208 = vmatpush1.msra.mxu0 0.0
        %209 = vmatprep.subr.mxu0 0.0
        %210 = vmatpush1.msra.mxu0 0.0
        %211 = vmatprep.subr.mxu0 0.0
        %212 = vmatpush1.msra.mxu0 0.0
        %213 = vmatprep.subr.mxu0 0.0
        %214 = vmatpush1.msra.mxu0 0.0
        %215 = vmatprep.subr.mxu0 0.0
        %216 = vmatpush1.msra.mxu0 0.0
        %217 = vmatprep.subr.mxu0 0.0
        %218 = vmatpush1.msra.mxu0 0.0
        %219 = vmatprep.subr.mxu0 0.0
        %220 = vmatpush1.msra.mxu0 0.0
        %221 = vmatprep.subr.mxu0 0.0
        %222 = vmatpush1.msra.mxu0 0.0
        %223 = vmatprep.subr.mxu0 0.0
        %224 = vmatpush1.msra.mxu0 0.0
        %225 = vmatprep.subr.mxu0 0.0
        %226 = vmatpush1.msra.mxu0 0.0
        %227 = vmatprep.subr.mxu0 0.0
        %228 = vmatpush1.msra.mxu0 %v176
        %229 = vmatprep.subr.mxu0 0.0
        %230 = vmatpush2.msra.mxu0 0.0
        %231 = vmatprep.subr.mxu0 0.0
        %232 = vmatpush2.msra.mxu0 0.0
        %233 = vmatprep.subr.mxu0 0.0
        %234 = vmatpush2.msra.mxu0 0.0
        %235 = vmatprep.subr.mxu0 0.0
        %236 = vmatpush2.msra.mxu0 0.0
        %237 = vmatprep.subr.mxu0 0.0
        %238 = vmatpush2.msra.mxu0 0.0
        %239 = vmatprep.subr.mxu0 0.0
        %240 = vmatpush2.msra.mxu0 0.0
        %241 = vmatprep.subr.mxu0 0.0
        %242 = vmatpush2.msra.mxu0 0.0
        %243 = vmatprep.subr.mxu0 0.0
        %244 = vmatpush2.msra.mxu0 0.0
        %245 = vmatprep.subr.mxu0 0.0
        %246 = vmatpush2.msra.mxu0 0.0
        %247 = vmatprep.subr.mxu0 0.0
        %248 = vmatpush2.msra.mxu0 0.0
        %249 = vmatprep.subr.mxu0 0.0
        %250 = vmatpush2.msra.mxu0 0.0
        %251 = vmatprep.subr.mxu0 0.0
        %252 = vmatpush2.msra.mxu0 0.0
        %253 = vmatprep.subr.mxu0 0.0
        %254 = vmatpush2.msra.mxu0 0.0
        %255 = vmatprep.subr.mxu0 0.0
        %256 = vmatpush2.msra.mxu0 0.0
        %257 = vmatprep.subr.mxu0 0.0
        %258 = vmatpush2.msra.mxu0 0.0
        %259 = vmatprep.subr.mxu0 0.0
        %260 = vmatpush2.msra.mxu0 0.0
        %261 = vmatprep.mubr.f32.mxu0 0.0
        %262 = vmatmul.mubr.f32.gmra.mxu0 %v186
        %v263 = vpop.f32.mrf.mxu0
        %v264 = vadd.f32 %v182, %v263
        %v265 = vpop.f32.mrf.mxu0
        %266 = vmatprep.mubr.f32.mxu0 0.0
        %267 = vmatmul.mubr.f32.gmra.mxu0 %v189
        %v268 = vpop.f32.mrf.mxu0
        %v269 = vadd.f32 %v182, %v268
        %v270 = vpop.f32.mrf.mxu0
        %271 = vmatprep.mubr.f32.mxu0 0.0
        %272 = vmatmul.mubr.f32.gmra.mxu0 %v192
        %v273 = vpop.f32.mrf.mxu0
        %v274 = vadd.f32 %v182, %v273
        %v275 = vpop.f32.mrf.mxu0
        %276 = vmatprep.mubr.f32.mxu0 0.0
        %277 = vmatmul.mubr.f32.gmra.mxu0 %v195
        %v278 = vpop.f32.mrf.mxu0
        %v279 = vadd.f32 %v182, %v278
        %v280 = vpop.f32.mrf.mxu0
        %281 = vdwg.mxu0
        %v282 = vmax.f32 %v264, 0.0
        %v283 = vmax.f32 %v269, 0.0
        %v284 = vmax.f32 %v274, 0.0
        %v285 = vmax.f32 %v279, 0.0
        %v286 = vand.u32 2147483647, %v264
        %v287 = vand.u32 2147483647, %v269
        %v288 = vand.u32 2147483647, %v274
        %v289 = vand.u32 2147483647, %v279
        %v290 = vsub.f32 0.0, %v286
        %v291 = vsub.f32 0.0, %v287
        %v292 = vsub.f32 0.0, %v288
        %v293 = vsub.f32 0.0, %v289
        %v294 = vmul.f32 %v290, 1.442695
        %v295 = vpow.pop %v294
        %v296 = vmul.f32 %v291, 1.442695
        %v297 = vpow.pop %v296
        %v298 = vmul.f32 %v292, 1.442695
        %v299 = vpow.pop %v298
        %v300 = vmul.f32 %v293, 1.442695
        %v301 = vpow.pop %v300
        %v302 = vadd.f32 %v295, 1.0
        %v303 = vlog2.pop %v302
        %v304 = vmul.f32 %v303, 0.6931472
        %v305 = vmul.f32 -0.5, %v295
        %v306 = vadd.f32 %v305, 1.0
        %v307 = vmul.f32 %v306, %v295
        %v308 = vand.u32 2147483647, %v295
        %vm309 = vcmp.lt.f32.partialorder %v308, 0.0004427343
        %v310 = vsel %vm309, %v307, %v304
        %v311 = vadd.f32 %v297, 1.0
        %v312 = vlog2.pop %v311
        %v313 = vmul.f32 %v312, 0.6931472
        %v314 = vmul.f32 -0.5, %v297
        %v315 = vadd.f32 %v314, 1.0
        %v316 = vmul.f32 %v315, %v297
        %v317 = vand.u32 2147483647, %v297
        %vm318 = vcmp.lt.f32.partialorder %v317, 0.0004427343
        %v319 = vsel %vm318, %v316, %v313
        %v320 = vadd.f32 %v299, 1.0
        %v321 = vlog2.pop %v320
        %v322 = vmul.f32 %v321, 0.6931472
        %v323 = vmul.f32 -0.5, %v299
        %v324 = vadd.f32 %v323, 1.0
        %v325 = vmul.f32 %v324, %v299
        %v326 = vand.u32 2147483647, %v299
        %vm327 = vcmp.lt.f32.partialorder %v326, 0.0004427343
        %v328 = vsel %vm327, %v325, %v322
        %v329 = vadd.f32 %v301, 1.0
        %v330 = vlog2.pop %v329
        %v331 = vmul.f32 %v330, 0.6931472
        %v332 = vmul.f32 -0.5, %v301
        %v333 = vadd.f32 %v332, 1.0
        %v334 = vmul.f32 %v333, %v301
        %v335 = vand.u32 2147483647, %v301
        %vm336 = vcmp.lt.f32.partialorder %v335, 0.0004427343
        %v337 = vsel %vm336, %v334, %v331
        %v338 = vadd.f32 %v282, %v310
        %v339 = vadd.f32 %v283, %v319
        %v340 = vadd.f32 %v284, %v328
        %v341 = vadd.f32 %v285, %v337
        %v342 = vadd.f32 %v338, 0.0001
        %v343 = vadd.f32 %v339, 0.0001
        %v344 = vadd.f32 %v340, 0.0001
        %v345 = vadd.f32 %v341, 0.0001
        %v346 = vlog2.pop %v342
        %v347 = vmul.f32 %v346, 0.6931472
        %v348 = vlog2.pop %v343
        %v349 = vmul.f32 %v348, 0.6931472
        %v350 = vlog2.pop %v344
        %v351 = vmul.f32 %v350, 0.6931472
        %v352 = vlog2.pop %v345
        %v353 = vmul.f32 %v352, 0.6931472
        %358 = vrot.lane.b32.xlu0 %v264, 120
        %v359 = vpop.permute.xlu0 %358
        %360 = vrot.lane.b32.xlu0 %v269, 120
        %v361 = vpop.permute.xlu0 %360
        %362 = vrot.lane.b32.xlu0 %v274, 120
        %v363 = vpop.permute.xlu0 %362
        %364 = vrot.lane.b32.xlu0 %v279, 120
        %v365 = vpop.permute.xlu0 %364
        %v370 = vmax.f32 %v264, %v359
        %v371 = vmax.f32 %v269, %v361
        %v372 = vmax.f32 %v274, %v363
        %v373 = vmax.f32 %v279, %v365
        %374 = vrot.lane.b32.xlu0 %v264, 112
        %v375 = vpop.permute.xlu0 %374
        %376 = vrot.lane.b32.xlu0 %v269, 112
        %v377 = vpop.permute.xlu0 %376
        %378 = vrot.lane.b32.xlu0 %v274, 112
        %v379 = vpop.permute.xlu0 %378
        %380 = vrot.lane.b32.xlu0 %v279, 112
        %v381 = vpop.permute.xlu0 %380
        %v386 = vmax.f32 %v370, %v375
        %v387 = vmax.f32 %v371, %v377
        %v388 = vmax.f32 %v372, %v379
        %v389 = vmax.f32 %v373, %v381
        %390 = vrot.lane.b32.xlu0 %v264, 104
        %v391 = vpop.permute.xlu0 %390
        %392 = vrot.lane.b32.xlu0 %v269, 104
        %v393 = vpop.permute.xlu0 %392
        %394 = vrot.lane.b32.xlu0 %v274, 104
        %v395 = vpop.permute.xlu0 %394
        %396 = vrot.lane.b32.xlu0 %v279, 104
        %v397 = vpop.permute.xlu0 %396
        %v402 = vmax.f32 %v386, %v391
        %v403 = vmax.f32 %v387, %v393
        %v404 = vmax.f32 %v388, %v395
        %v405 = vmax.f32 %v389, %v397
        %v406 = vsub.f32 %v264, %v402
        %v407 = vsub.f32 %v269, %v403
        %v408 = vsub.f32 %v274, %v404
        %v409 = vsub.f32 %v279, %v405
        %v410 = vmul.f32 %v406, 1.442695
        %v411 = vpow.pop %v410
        %v412 = vmul.f32 %v407, 1.442695
        %v413 = vpow.pop %v412
        %v414 = vmul.f32 %v408, 1.442695
        %v415 = vpow.pop %v414
        %v416 = vmul.f32 %v409, 1.442695
        %v417 = vpow.pop %v416
        %422 = vrot.lane.b32.xlu0 %v402, 8
        %v423 = vpop.permute.xlu0 %422
        %424 = vrot.lane.b32.xlu0 %v403, 8
        %v425 = vpop.permute.xlu0 %424
        %426 = vrot.lane.b32.xlu0 %v404, 8
        %v427 = vpop.permute.xlu0 %426
        %428 = vrot.lane.b32.xlu0 %v405, 8
        %v429 = vpop.permute.xlu0 %428
        %v434 = vsub.f32 %v264, %v423
        %v435 = vsub.f32 %v269, %v425
        %v436 = vsub.f32 %v274, %v427
        %v437 = vsub.f32 %v279, %v429
        %v438 = vmul.f32 %v434, 1.442695
        %v439 = vpow.pop %v438
        %v440 = vmul.f32 %v435, 1.442695
        %v441 = vpow.pop %v440
        %v442 = vmul.f32 %v436, 1.442695
        %v443 = vpow.pop %v442
        %v444 = vmul.f32 %v437, 1.442695
        %v445 = vpow.pop %v444
        %450 = vrot.lane.b32.xlu0 %v439, 120
        %v451 = vpop.permute.xlu0 %450
        %452 = vrot.lane.b32.xlu0 %v441, 120
        %v453 = vpop.permute.xlu0 %452
        %454 = vrot.lane.b32.xlu0 %v443, 120
        %v455 = vpop.permute.xlu0 %454
        %456 = vrot.lane.b32.xlu0 %v445, 120
        %v457 = vpop.permute.xlu0 %456
        %v462 = vadd.f32 %v411, %v451
        %v463 = vadd.f32 %v413, %v453
        %v464 = vadd.f32 %v415, %v455
        %v465 = vadd.f32 %v417, %v457
        %466 = vrot.lane.b32.xlu0 %v402, 16
        %v467 = vpop.permute.xlu0 %466
        %468 = vrot.lane.b32.xlu0 %v403, 16
        %v469 = vpop.permute.xlu0 %468
        %470 = vrot.lane.b32.xlu0 %v404, 16
        %v471 = vpop.permute.xlu0 %470
        %472 = vrot.lane.b32.xlu0 %v405, 16
        %v473 = vpop.permute.xlu0 %472
        %v478 = vsub.f32 %v264, %v467
        %v479 = vsub.f32 %v269, %v469
        %v480 = vsub.f32 %v274, %v471
        %v481 = vsub.f32 %v279, %v473
        %v482 = vmul.f32 %v478, 1.442695
        %v483 = vpow.pop %v482
        %v484 = vmul.f32 %v479, 1.442695
        %v485 = vpow.pop %v484
        %v486 = vmul.f32 %v480, 1.442695
        %v487 = vpow.pop %v486
        %v488 = vmul.f32 %v481, 1.442695
        %v489 = vpow.pop %v488
        %494 = vrot.lane.b32.xlu0 %v483, 112
        %v495 = vpop.permute.xlu0 %494
        %496 = vrot.lane.b32.xlu0 %v485, 112
        %v497 = vpop.permute.xlu0 %496
        %498 = vrot.lane.b32.xlu0 %v487, 112
        %v499 = vpop.permute.xlu0 %498
        %500 = vrot.lane.b32.xlu0 %v489, 112
        %v501 = vpop.permute.xlu0 %500
        %v506 = vadd.f32 %v462, %v495
        %v507 = vadd.f32 %v463, %v497
        %v508 = vadd.f32 %v464, %v499
        %v509 = vadd.f32 %v465, %v501
        %510 = vrot.lane.b32.xlu0 %v402, 24
        %v511 = vpop.permute.xlu0 %510
        %512 = vrot.lane.b32.xlu0 %v403, 24
        %v513 = vpop.permute.xlu0 %512
        %514 = vrot.lane.b32.xlu0 %v404, 24
        %v515 = vpop.permute.xlu0 %514
        %516 = vrot.lane.b32.xlu0 %v405, 24
        %v517 = vpop.permute.xlu0 %516
        %v522 = vsub.f32 %v264, %v511
        %v523 = vsub.f32 %v269, %v513
        %v524 = vsub.f32 %v274, %v515
        %v525 = vsub.f32 %v279, %v517
        %v526 = vmul.f32 %v522, 1.442695
        %v527 = vpow.pop %v526
        %v528 = vmul.f32 %v523, 1.442695
        %v529 = vpow.pop %v528
        %v530 = vmul.f32 %v524, 1.442695
        %v531 = vpow.pop %v530
        %v532 = vmul.f32 %v525, 1.442695
        %v533 = vpow.pop %v532
        %538 = vrot.lane.b32.xlu0 %v527, 104
        %v539 = vpop.permute.xlu0 %538
        %540 = vrot.lane.b32.xlu0 %v529, 104
        %v541 = vpop.permute.xlu0 %540
        %542 = vrot.lane.b32.xlu0 %v531, 104
        %v543 = vpop.permute.xlu0 %542
        %544 = vrot.lane.b32.xlu0 %v533, 104
        %v545 = vpop.permute.xlu0 %544
        %v550 = vadd.f32 %v506, %v539
        %v551 = vadd.f32 %v507, %v541
        %v552 = vadd.f32 %v508, %v543
        %v553 = vadd.f32 %v509, %v545
        %v554 = vlog2.pop %v550
        %v555 = vmul.f32 %v554, 0.6931472
        %v556 = vlog2.pop %v551
        %v557 = vmul.f32 %v556, 0.6931472
        %v558 = vlog2.pop %v552
        %v559 = vmul.f32 %v558, 0.6931472
        %v560 = vlog2.pop %v553
        %v561 = vmul.f32 %v560, 0.6931472
        %v562 = vadd.f32 %v402, %v555
        %v563 = vadd.f32 %v403, %v557
        %v564 = vadd.f32 %v404, %v559
        %v565 = vadd.f32 %v405, %v561
        %570 = vrot.lane.b32.xlu0 %v562, 64
        %v571 = vpop.permute.xlu0 %570
        %572 = vrot.lane.b32.xlu0 %v563, 64
        %v573 = vpop.permute.xlu0 %572
        %574 = vrot.lane.b32.xlu0 %v564, 64
        %v575 = vpop.permute.xlu0 %574
        %576 = vrot.lane.b32.xlu0 %v565, 64
        %v577 = vpop.permute.xlu0 %576
        %582 = vrot.lane.b32.xlu0 %v562, 72
        %v583 = vpop.permute.xlu0 %582
        %584 = vrot.lane.b32.xlu0 %v563, 72
        %v585 = vpop.permute.xlu0 %584
        %586 = vrot.lane.b32.xlu0 %v564, 72
        %v587 = vpop.permute.xlu0 %586
        %588 = vrot.lane.b32.xlu0 %v565, 72
        %v589 = vpop.permute.xlu0 %588
        %594 = vrot.lane.b32.xlu0 %v562, 80
        %v595 = vpop.permute.xlu0 %594
        %596 = vrot.lane.b32.xlu0 %v563, 80
        %v597 = vpop.permute.xlu0 %596
        %598 = vrot.lane.b32.xlu0 %v564, 80
        %v599 = vpop.permute.xlu0 %598
        %600 = vrot.lane.b32.xlu0 %v565, 80
        %v601 = vpop.permute.xlu0 %600
        %606 = vrot.lane.b32.xlu0 %v562, 88
        %v607 = vpop.permute.xlu0 %606
        %608 = vrot.lane.b32.xlu0 %v563, 88
        %v609 = vpop.permute.xlu0 %608
        %610 = vrot.lane.b32.xlu0 %v564, 88
        %v611 = vpop.permute.xlu0 %610
        %612 = vrot.lane.b32.xlu0 %v565, 88
        %v613 = vpop.permute.xlu0 %612
        %v618 = vsel %vm184, %v571, %v583
        %v619 = vsel %vm184, %v573, %v585
        %v620 = vsel %vm184, %v575, %v587
        %v621 = vsel %vm184, %v577, %v589
        %vm622 = vcmask 130048
        %v623 = vsel %vm622, %v618, %v595
        %v624 = vsel %vm622, %v619, %v597
        %v625 = vsel %vm622, %v620, %v599
        %v626 = vsel %vm622, %v621, %v601
        %vm627 = vcmask 195584
        %v628 = vsel %vm627, %v623, %v607
        %v629 = vsel %vm627, %v624, %v609
        %v630 = vsel %vm627, %v625, %v611
        %v631 = vsel %vm627, %v626, %v613
        %636 = vrot.lane.b32.xlu0 %v628, 64
        %v637 = vpop.permute.xlu0 %636
        %638 = vrot.lane.b32.xlu0 %v629, 64
        %v639 = vpop.permute.xlu0 %638
        %640 = vrot.lane.b32.xlu0 %v630, 64
        %v641 = vpop.permute.xlu0 %640
        %642 = vrot.lane.b32.xlu0 %v631, 64
        %v643 = vpop.permute.xlu0 %642
        %v648 = vsub.f32 %v264, %v637
        %v649 = vsub.f32 %v269, %v639
        %v650 = vsub.f32 %v274, %v641
        %v651 = vsub.f32 %v279, %v643
        %vm652 = vcmask 261120
        %v653 = vsel %vm652, %v264, %v347
        %v654 = vsel %vm652, %v269, %v349
        %v655 = vsel %vm652, %v274, %v351
        %v656 = vsel %vm652, %v279, %v353
        %vm657 = vcmask 523264
        %v658 = vsel %vm657, %v653, %v648
        %v659 = vsel %vm657, %v654, %v649
        %v660 = vsel %vm657, %v655, %v650
        %v661 = vsel %vm657, %v656, %v651
        %vm662 = vcmask 785408
        %v663 = vsel %vm662, %v658, 0.0
        %v664 = vsel %vm662, %v659, 0.0
        %v665 = vsel %vm662, %v660, 0.0
        %v666 = vsel %vm662, %v661, 0.0
        %667 = vst [vmem:[%s164] sm:$0xff] %v663
        %668 = vst [vmem:[%s164 + $0x8] sm:$0xff] %v664
        %669 = vst [vmem:[%s164 + $0x10] sm:$0xff] %v665
        %670 = vst [vmem:[%s164 + $0x18] sm:$0xff] %v666
        %s671 = sand.u32 %s93, 1
        %s672 = scalar_lea.sflag [#allocation3], %s671
        %s673 = sand.u32 %s93, 1
        %s674 = smul.addr %s673, 32
        %s675 = scalar_lea.vmem [#allocation2], %s674
        // Predicated region
        $region33: #{tpu_custom_call.1} parent=31 // pred_check
          %p676 = pneg %p103
        $region34: #{tpu_custom_call.1} parent=31 // pred_check_branch
          %678 = sbr.rel (%p676) target = $region36
        $region35: #{tpu_custom_call.1} parent=31 // pred_region
          %s679 = smul.u32 4, %s17
          %s681 = ssub.s32 512, 512
          %682 = vsyncadd %s672, %s681
          %s683 = smul.addr %s679, 128
          %s684 = scalar_lea.hbm %s3, %s683
          %s685 = sshll.u32 %s675, 4
          %s686 = int_to_ptr.vmem [resolvable:$true] %s685
          %691 = dma.vmem_to_hbm [thread:$0]  %s686, 512, %s684, %s672, 128, 128, 8
        $region36: #{tpu_custom_call.1} parent=31 // pred_fallthru
          _
      $region32: #{tpu_custom_call.1} parent=5 // pred_fallthru
        _
      %p692 = scmp.le.s32.totalorder 2, %s12
      // Predicated region
      $region37: #{tpu_custom_call.1} parent=5 // pred_check
        %p693 = pneg %p692
      $region38: #{tpu_custom_call.1} parent=5 // pred_check_branch
        %695 = sbr.rel (%p693) target = $region40
      $region39: #{tpu_custom_call.1} parent=5 // pred_region
        %s696 = ssub.s32 %s12, 2
        // Predicated region
        $region41: #{tpu_custom_call.1} parent=39 // pred_check
          %p697 = pneg %p109
        $region42: #{tpu_custom_call.1} parent=39 // pred_check_branch
          %699 = sbr.rel (%p697) target = $region44
        $region43: #{tpu_custom_call.1} parent=39 // pred_region
          %s700 = sand.u32 %s94, 1
          %s701 = scalar_lea.sflag [#allocation3], %s700
          %s702 = sand.u32 %s94, 1
          %s703 = smul.addr %s702, 32
          %s704 = scalar_lea.vmem [#allocation2], %s703
          %705 = dma.done %s701, 512
        $region44: #{tpu_custom_call.1} parent=39 // pred_fallthru
          _
      $region40: #{tpu_custom_call.1} parent=5 // pred_fallthru
        _
    $region6: #{tpu_custom_call.1} parent=1 // loop_footer
      %s16 = sadd.s32 1, %s12
    $region7: #{tpu_custom_call.1} parent=1 // loop_footer_branch
      %11 = sbr.rel target = $region3
    $region8: #{tpu_custom_call.1} parent=1 // loop_exit
      _
    %706 = vsyncpa [#allocation3], 1
    %s707 = scalar_lea.sflag [#allocation3], 1
    %708 = vsyncpa %s707, 1

</llo_original>
